<compile_context>
chip_gen: v5e
topology: v5e:2x2
jax: 0.10.0
libtpu: 0.0.40
codegen_flags: <defaults>
</compile_context>

<pallas_src>
import functools

import jax
import jax.numpy as jnp
import numpy as np
from jax import lax
from jax.experimental import pallas as pl
from jax.experimental.pallas import tpu as pltpu

VMEM_LIMIT = 32 * 1024 * 1024  # fits comfortably under v7x's 64 MiB/TC; tiles use <10 MiB


def _round_up(x, m):
    return (x + m - 1) // m * m


def _pick_tile(dim, cands=(512, 256, 128)):
    """Largest tile in `cands` that evenly divides `dim` (dim is a multiple of 128)."""
    for c in cands:
        if dim % c == 0:
            return c
    return dim


# ---------------------------------------------------------------------------
# Pallas kernels
# ---------------------------------------------------------------------------
def _matmul_bias_kernel(a_ref, b_ref, bias_ref, o_ref, *, relu):
    # bf16 x bf16 on the MXU, f32 accumulation.
    acc = jnp.dot(a_ref[...], b_ref[...], preferred_element_type=jnp.float32)
    acc = acc + bias_ref[...]
    if relu:
        acc = jnp.maximum(acc, 0.0)
    o_ref[...] = acc.astype(o_ref.dtype)


def matmul_bias(a, b, bias, *, relu, out_dtype=jnp.bfloat16):
    """(M,K) @ (K,N) + bias (+ReLU) with a Pallas tiled kernel (bf16 operands)."""
    M, K = a.shape
    K2, N = b.shape
    assert K == K2
    Kp = _round_up(K, 128)
    Np = _round_up(N, 128)
    Mp = _round_up(M, 128)
    if Mp >= 2048:
        # Big early-layer matmuls: amortize per-step overhead with 512-row tiles.
        tm = 512
        Mp = _round_up(M, tm)
    else:
        tm = _pick_tile(Mp)
    tn = _pick_tile(Np)
    # Deep, narrow-M layers: expose >=2 parallel grid steps (v7x: 2 TensorCores/chip).
    if Mp // tm == 1 and Np // tn == 1 and Np >= 512:
        tn = Np // 2

    a = a.astype(jnp.bfloat16)
    b = b.astype(jnp.bfloat16)
    bias = bias.astype(jnp.float32)
    if (Mp, Kp) != (M, K):
        a = jnp.pad(a, ((0, Mp - M), (0, Kp - K)))
    if (Kp, Np) != (K, N):
        b = jnp.pad(b, ((0, Kp - K), (0, Np - N)))
    if Np != N:
        bias = jnp.pad(bias, (0, Np - N))
    bias = bias.reshape(1, Np)

    out = pl.pallas_call(
        functools.partial(_matmul_bias_kernel, relu=relu),
        out_shape=jax.ShapeDtypeStruct((Mp, Np), out_dtype),
        grid=(Mp // tm, Np // tn),
        in_specs=[
            pl.BlockSpec((tm, Kp), lambda i, j: (i, 0)),
            pl.BlockSpec((Kp, tn), lambda i, j: (0, j)),
            pl.BlockSpec((1, tn), lambda i, j: (0, j)),
        ],
        out_specs=pl.BlockSpec((tm, tn), lambda i, j: (i, j)),
        compiler_params=pltpu.CompilerParams(
            dimension_semantics=("parallel", "parallel"),
            vmem_limit_bytes=VMEM_LIMIT,
        ),
    )(a, b, bias)
    if (Mp, Np) != (M, N):
        out = out[:M, :N]
    return out


def _max_reduce_kernel(x_ref, o_ref):
    o_ref[...] = jnp.max(x_ref[...], axis=0)


def maxpool2d(x, *, k, stride, padding):
    """MaxPool2d(kernel=k, stride, padding) on NHWC via a Pallas max reduction (bf16)."""
    N, H, W, C = x.shape
    Ho = (H + 2 * padding - k) // stride + 1
    Wo = (W + 2 * padding - k) // stride + 1
    xp = jnp.pad(x, ((0, 0), (padding, padding), (padding, padding), (0, 0)),
                 constant_values=-jnp.inf)
    slices = []
    for i in range(k):
        for j in range(k):
            slices.append(
                xp[:, i:i + stride * (Ho - 1) + 1:stride,
                      j:j + stride * (Wo - 1) + 1:stride, :])
    M = N * Ho * Wo
    tm = 256 if M >= 512 else 128
    Mp = _round_up(M, tm)
    # TODO(synk): the k*k shifted views are still materialized in HBM (stride-2 window
    # gathers are not expressible with plain block index_maps); bf16 halves that traffic.
    stacked = jnp.stack(slices, axis=0).reshape(k * k, M, C)
    if Mp != M:
        stacked = jnp.pad(stacked, ((0, 0), (0, Mp - M), (0, 0)),
                          constant_values=-jnp.inf)
    out = pl.pallas_call(
        _max_reduce_kernel,
        out_shape=jax.ShapeDtypeStruct((Mp, C), x.dtype),
        grid=(Mp // tm,),
        in_specs=[pl.BlockSpec((k * k, tm, C), lambda i: (0, i, 0))],
        out_specs=pl.BlockSpec((tm, C), lambda i: (i, 0)),
        compiler_params=pltpu.CompilerParams(
            dimension_semantics=("parallel",),
            vmem_limit_bytes=VMEM_LIMIT,
        ),
    )(stacked)
    if Mp != M:
        out = out[:M]
    return out.reshape(N, Ho, Wo, C)


def _avgpool_kernel(x_ref, o_ref):
    o_ref[...] = jnp.mean(x_ref[...].astype(jnp.float32), axis=1)


def global_avgpool(x):
    """AvgPool2d(kernel=H) on an (N, H, H, C) tensor -> (N, C) via Pallas mean (f32 acc)."""
    N, H, W, C = x.shape
    xr = x.reshape(N, H * W, C)
    return pl.pallas_call(
        _avgpool_kernel,
        out_shape=jax.ShapeDtypeStruct((N, C), jnp.float32),
        grid=(1,),
        in_specs=[pl.BlockSpec((N, H * W, C), lambda i: (0, 0, 0))],
        out_specs=pl.BlockSpec((N, C), lambda i: (0, 0)),
        compiler_params=pltpu.CompilerParams(vmem_limit_bytes=VMEM_LIMIT),
    )(xr)


# ---------------------------------------------------------------------------
# Conv / blocks built on the Pallas matmul kernel
# ---------------------------------------------------------------------------
def conv2d(x, w, b, *, stride, padding, relu, out_dtype=jnp.bfloat16):
    """nn.Conv2d equivalent via im2col (JAX glue) + Pallas matmul kernel."""
    N, H, W, C = x.shape
    kh, kw, _, Cout = w.shape
    Ho = (H + 2 * padding - kh) // stride + 1
    Wo = (W + 2 * padding - kw) // stride + 1
    if kh == 1 and kw == 1 and stride == 1 and padding == 0:
        a = x.reshape(N * H * W, C)          # 1x1 conv: no im2col copy at all
    else:
        # TODO(synk): kh*kw-shifted im2col views are still staged through HBM; doing the
        # window gather inside the kernel needs Element-offset blocks and is left out.
        xp = jnp.pad(x, ((0, 0), (padding, padding), (padding, padding), (0, 0)))
        cols = []
        for i in range(kh):
            for j in range(kw):
                cols.append(
                    xp[:, i:i + stride * (Ho - 1) + 1:stride,
                          j:j + stride * (Wo - 1) + 1:stride, :])
        a = jnp.concatenate(cols, axis=-1).reshape(N * Ho * Wo, kh * kw * C)
    out = matmul_bias(a, w.reshape(kh * kw * C, Cout), b, relu=relu, out_dtype=out_dtype)
    return out.reshape(N, Ho, Wo, Cout)


def conv_block(x, p, *, stride=1, padding=0):
    # ConvBlock = Conv2d + ReLU (ReLU fused into the Pallas matmul kernel).
    return conv2d(x, p["w"], p["b"], stride=stride, padding=padding, relu=True)


def inception(x, p):
    # Fuse the three 1x1 convs that share x (branch1, branch2-reduce, branch3-reduce)
    # into a single wide-N matmul, then split the channel slab.
    n1 = p["b1"]["w"].shape[-1]
    n2 = p["b2a"]["w"].shape[-1]
    w_f = jnp.concatenate([p["b1"]["w"], p["b2a"]["w"], p["b3a"]["w"]], axis=-1)
    b_f = jnp.concatenate([p["b1"]["b"], p["b2a"]["b"], p["b3a"]["b"]], axis=-1)
    fused = conv2d(x, w_f, b_f, stride=1, padding=0, relu=True)
    br1 = fused[..., :n1]
    br2 = conv_block(fused[..., n1:n1 + n2], p["b2b"], padding=1)
    br3 = conv_block(fused[..., n1 + n2:], p["b3b"], padding=2)
    br4 = conv_block(maxpool2d(x, k=3, stride=1, padding=1), p["b4"])
    # torch.cat(dim=1) on NCHW == channel concat == last axis in NHWC.
    return jnp.concatenate([br1, br2, br3, br4], axis=-1)


# ---------------------------------------------------------------------------
# Parameters (deterministic synthetic init; weights stored bf16, biases f32)
# ---------------------------------------------------------------------------
def _conv_init(key, kh, kw, cin, cout):
    wk, bk = jax.random.split(key)
    fan_in = kh * kw * cin
    w = (jax.random.normal(wk, (kh, kw, cin, cout), jnp.float32)
         * np.sqrt(2.0 / fan_in)).astype(jnp.bfloat16)
    b = jax.random.normal(bk, (cout,), jnp.float32) * 0.01
    return {"w": w, "b": b}


def _inception_init(key, cin, ch1x1, ch3x3red, ch3x3, ch5x5red, ch5x5, pool_proj):
    ks = jax.random.split(key, 6)
    return {
        "b1": _conv_init(ks[0], 1, 1, cin, ch1x1),
        "b2a": _conv_init(ks[1], 1, 1, cin, ch3x3red),
        "b2b": _conv_init(ks[2], 3, 3, ch3x3red, ch3x3),
        "b3a": _conv_init(ks[3], 1, 1, cin, ch5x5red),
        "b3b": _conv_init(ks[4], 5, 5, ch5x5red, ch5x5),
        "b4": _conv_init(ks[5], 1, 1, cin, pool_proj),
    }


INCEPTION_CFG = {
    "icp_3a": (192, 64, 96, 128, 16, 32, 32),
    "icp_3b": (256, 128, 128, 192, 32, 96, 64),
    "icp_4a": (480, 192, 96, 208, 16, 48, 64),
    "icp_4b": (512, 160, 112, 224, 24, 64, 64),
    "icp_4c": (512, 128, 128, 256, 24, 64, 64),
    "icp_4d": (512, 112, 144, 288, 32, 64, 64),
    "icp_4e": (528, 256, 160, 320, 32, 128, 128),
    "icp_5a": (832, 256, 160, 320, 32, 128, 128),
    "icp_5b": (832, 384, 192, 384, 48, 128, 128),
}


def init_params(key, in_channels):
    n_keys = 4 + len(INCEPTION_CFG)
    keys = jax.random.split(key, n_keys)
    params = {
        "conv1": _conv_init(keys[0], 7, 7, in_channels, 64),
        "conv2_red": _conv_init(keys[1], 1, 1, 64, 64),
        "conv2": _conv_init(keys[2], 3, 3, 64, 192),
    }
    for i, (name, cfg) in enumerate(INCEPTION_CFG.items()):
        params[name] = _inception_init(keys[3 + i], *cfg)
    fk_w, fk_b = jax.random.split(keys[3 + len(INCEPTION_CFG)])
    params["fc6"] = {
        "w": (jax.random.normal(fk_w, (1024, 1000), jnp.float32)
              * np.sqrt(1.0 / 1024)).astype(jnp.bfloat16),
        "b": jax.random.normal(fk_b, (1000,), jnp.float32) * 0.01,
    }
    return params


# ---------------------------------------------------------------------------
# Full GoogLeNet forward
# ---------------------------------------------------------------------------
def googlenet_forward(params, x_nchw):
    p = params
    x = jnp.transpose(x_nchw, (0, 2, 3, 1)).astype(jnp.bfloat16)   # NCHW -> NHWC, bf16
    # conv1 / conv2_red / conv2 are bare nn.Conv2d in the reference (no ReLU).
    x = conv2d(x, p["conv1"]["w"], p["conv1"]["b"], stride=2, padding=3, relu=False)
    x = maxpool2d(x, k=3, stride=2, padding=1)
    x = conv2d(x, p["conv2_red"]["w"], p["conv2_red"]["b"], stride=1, padding=0, relu=False)
    x = conv2d(x, p["conv2"]["w"], p["conv2"]["b"], stride=1, padding=1, relu=False)
    x = maxpool2d(x, k=3, stride=2, padding=1)
    x = inception(x, p["icp_3a"])
    x = inception(x, p["icp_3b"])
    x = maxpool2d(x, k=3, stride=2, padding=1)
    for name in ("icp_4a", "icp_4b", "icp_4c", "icp_4d", "icp_4e"):
        x = inception(x, p[name])
    x = maxpool2d(x, k=3, stride=2, padding=1)
    x = inception(x, p["icp_5a"])
    x = inception(x, p["icp_5b"])
    x = global_avgpool(x)                     # AvgPool2d(7) -> (N, 1024), f32
    x = x.reshape(x.shape[0], -1)             # x.view(x.size(0), -1)
    logits = matmul_bias(x, p["fc6"]["w"], p["fc6"]["b"], relu=False,
                         out_dtype=jnp.float32)
    return logits


# ---------------------------------------------------------------------------
if __name__ == "__main__":
    key = jax.random.PRNGKey(0)
    pkey, xkey, ckey = jax.random.split(key, 3)

    # --- small-shape sanity checks of the Pallas building blocks vs lax ---
    cx = jax.random.normal(ckey, (1, 4, 8, 8), jnp.float32)
    cx_nhwc = jnp.transpose(cx, (0, 2, 3, 1)).astype(jnp.bfloat16)
    cw = (jax.random.normal(jax.random.PRNGKey(1), (3, 3, 4, 8), jnp.float32)
          * 0.1).astype(jnp.bfloat16)
    cb = jax.random.normal(jax.random.PRNGKey(2), (8,), jnp.float32) * 0.1
    ours = conv2d(cx_nhwc, cw, cb, stride=2, padding=1, relu=True)
    ref = lax.conv_general_dilated(
        cx_nhwc.astype(jnp.float32), cw.astype(jnp.float32),
        window_strides=(2, 2), padding=((1, 1), (1, 1)),
        dimension_numbers=("NHWC", "HWIO", "NHWC")) + cb
    ref = jnp.maximum(ref, 0.0)
    np.testing.assert_allclose(np.asarray(ours.astype(jnp.float32)),
                               np.asarray(ref), rtol=2e-2, atol=2e-2)

    mp_ours = maxpool2d(cx_nhwc, k=3, stride=2, padding=1)
    mp_ref = lax.reduce_window(cx_nhwc.astype(jnp.float32), -jnp.inf, lax.max,
                               (1, 3, 3, 1), (1, 2, 2, 1),
                               ((0, 0), (1, 1), (1, 1), (0, 0)))
    np.testing.assert_allclose(np.asarray(mp_ours.astype(jnp.float32)),
                               np.asarray(mp_ref), rtol=0, atol=0)

    # --- full GoogLeNet forward ---
    in_channels = 3
    params = init_params(pkey, in_channels)
    # 224x224 input is required by the architecture (avgpool5 kernel=7 + fc6 in_features=1024).
    x = jax.random.normal(xkey, (1, in_channels, 224, 224), jnp.float32)
    fwd = jax.jit(googlenet_forward)
    logits = jax.block_until_ready(fwd(params, x))
    assert logits.shape == (1, 1000), logits.shape
    assert bool(jnp.all(jnp.isfinite(logits))), "non-finite output"
    print("KERNEL_OK")
</pallas_src>

<mosaic_0001>
module attributes {stable_mosaic.version = 11 : i64} {
  func.func @_matmul_bias_kernel(%arg0: i32, %arg1: i32, %arg2: memref<128x128xbf16, #tpu.memory_space<vmem>>, %arg3: memref<128x128xbf16, #tpu.memory_space<vmem>>, %arg4: memref<1x128xf32, #tpu.memory_space<vmem>>, %arg5: memref<128x128xbf16, #tpu.memory_space<vmem>>) attributes {dimension_semantics = [#tpu.dimension_semantics<parallel>, #tpu.dimension_semantics<parallel>], iteration_bounds = array<i64: 1, 1>, scalar_prefetch = 0 : i64, scratch_operands = 0 : i64, tpu.core_type = #tpu.core_type<tc>, window_params = [{transform_indices = @transform_0, window_bounds = array<i64: 128, 128>}, {transform_indices = @transform_1, window_bounds = array<i64: 128, 128>}, {transform_indices = @transform_2, window_bounds = array<i64: 1, 128>}, {transform_indices = @transform_3, window_bounds = array<i64: 128, 128>}]} {
    %c0 = arith.constant 0 : index
    %c0_0 = arith.constant 0 : index
    %0 = vector.load %arg2[%c0, %c0_0] : memref<128x128xbf16, #tpu.memory_space<vmem>>, vector<128x128xbf16>
    %c0_1 = arith.constant 0 : index
    %c0_2 = arith.constant 0 : index
    %1 = vector.load %arg3[%c0_1, %c0_2] : memref<128x128xbf16, #tpu.memory_space<vmem>>, vector<128x128xbf16>
    %cst = arith.constant dense<0.000000e+00> : vector<128x128xf32>
    %2 = tpu.matmul %0, %1, %cst {dimension_numbers = #tpu.dot_dimension_numbers<[1], [0], [0], [1], [0, 0, 1, 1], [], []>} : vector<128x128xbf16>, vector<128x128xbf16>, vector<128x128xf32> -> vector<128x128xf32>
    %c0_3 = arith.constant 0 : index
    %c0_4 = arith.constant 0 : index
    %3 = vector.load %arg4[%c0_3, %c0_4] : memref<1x128xf32, #tpu.memory_space<vmem>>, vector<1x128xf32>
    %4 = vector.broadcast %3 : vector<1x128xf32> to vector<128x128xf32>
    %5 = arith.addf %2, %4 : vector<128x128xf32>
    %cst_5 = arith.constant 0.000000e+00 : f32
    %6 = vector.broadcast %cst_5 : f32 to vector<128x128xf32>
    %7 = arith.maximumf %5, %6 : vector<128x128xf32>
    %8 = arith.truncf %7 : vector<128x128xf32> to vector<128x128xbf16>
    %c0_6 = arith.constant 0 : index
    %c0_7 = arith.constant 0 : index
    %9 = vector.load %arg5[%c0_6, %c0_7] : memref<128x128xbf16, #tpu.memory_space<vmem>>, vector<128x128xbf16>
    tpu.vector_store %arg5[%c0_6, %c0_7], %8 {strides = array<i32>} : memref<128x128xbf16, #tpu.memory_space<vmem>>, vector<128x128xbf16>,
    return
  }
  func.func @transform_0(%arg0: i32, %arg1: i32) -> (i32, i32) {
    %c0_i32 = arith.constant 0 : i32
    %c0_i32_0 = arith.constant 0 : i32
    return %arg0, %c0_i32 : i32, i32
  }
  func.func @transform_1(%arg0: i32, %arg1: i32) -> (i32, i32) {
    %c0_i32 = arith.constant 0 : i32
    %c0_i32_0 = arith.constant 0 : i32
    return %c0_i32, %arg1 : i32, i32
  }
  func.func @transform_2(%arg0: i32, %arg1: i32) -> (i32, i32) {
    %c0_i32 = arith.constant 0 : i32
    %c0_i32_0 = arith.constant 0 : i32
    return %c0_i32, %arg1 : i32, i32
  }
  func.func @transform_3(%arg0: i32, %arg1: i32) -> (i32, i32) {
    %c0_i32 = arith.constant 0 : i32
    return %arg0, %arg1 : i32, i32
  }
}

</mosaic_0001>

<llo_original>
// kernel: tpu_custom_call.1
$region0: #{tpu_custom_call.1}
  #allocation0 [shape = 'u32[]', space=smem, size = 0x4, offset = 0x4, fixed_abs, tag = 'smem constant byte address 0x4 - core index']
  #allocation1 [shape = 'u32[72,128]{1,0:T(1,128)}', space=vmem, size = 0x9000, scoped, tag = 'internal scratch']
  %s0 = inlined_call_operand.hbm [shape: bf16[128,128], index: 0, kind: input, shape index: {}]
  %s1 = inlined_call_operand.hbm [shape: bf16[128,128], index: 1, kind: input, shape index: {}]
  %s2 = inlined_call_operand.vmem [shape: f32[1,128], index: 2, kind: input, shape index: {}]
  %s3 = inlined_call_operand.hbm [shape: bf16[128,128], index: 3, kind: output, shape index: {}]
  %s4 = sld [smem:[#allocation0]]
  $region30: #{tpu_custom_call.1} parent=0
    _
  %s6 = ssub.s32 1, %s4
  %s7 = scalar_select 0, %s6, %s4
  $region1: #{tpu_custom_call.1} parent=0
    #allocation2 [shape = 'u8[32768]{0}', space=vmem, size = 0x8000, scoped, tag = 'input window, operand 0, single buffered']
    #allocation3 [shape = 's32[1]{0}', space=sflag, size = 0x4, scoped, tag = 'scoped memory for tpu_custom_call.1']
    #allocation4 [shape = 's32[1]{0}', space=sflag, size = 0x4, scoped, tag = 'scoped memory for tpu_custom_call.1']
    #allocation5 [shape = 'u8[32768]{0}', space=vmem, size = 0x8000, scoped, tag = 'input window, operand 1, single buffered']
    #allocation6 [shape = 's32[1]{0}', space=sflag, size = 0x4, scoped, tag = 'scoped memory for tpu_custom_call.1']
    #allocation7 [shape = 'u8[32768]{0}', space=vmem, size = 0x8000, scoped, tag = 'output window, operand 0, single buffered']
    %8 = vsyncpa [#allocation3], 0
    %9 = vsyncpa [#allocation6], 0
    %10 = vsyncpa [#allocation4], 0
    // Predicated region
    $region2: #{tpu_custom_call.1} parent=1 // pred_check
      _
    $region3: #{tpu_custom_call.1} parent=1 // pred_check_branch
      %12 = sbr.rel (0) target = $region5
    $region4: #{tpu_custom_call.1} parent=1 // pred_region
      %14 = vsyncadd [#allocation3], 0
      %s15 = sshll.u32 %s0, 4
      %s16 = int_to_ptr.hbm [resolvable:$true] %s15
      %s17 = sshll.u32 [#allocation2], 4
      %s18 = int_to_ptr.vmem [resolvable:$true] %s17
      %23 = dma.hbm_to_vmem [thread:$0]  %s16, 1024, %s18, [#allocation3], 64, 64, 4
    $region5: #{tpu_custom_call.1} parent=1 // pred_fallthru
      _
    // Predicated region
    $region6: #{tpu_custom_call.1} parent=1 // pred_check
      _
    $region7: #{tpu_custom_call.1} parent=1 // pred_check_branch
      %25 = sbr.rel (0) target = $region9
    $region8: #{tpu_custom_call.1} parent=1 // pred_region
      %27 = vsyncadd [#allocation6], 0
      %s28 = sshll.u32 %s1, 4
      %s29 = int_to_ptr.hbm [resolvable:$true] %s28
      %s30 = sshll.u32 [#allocation5], 4
      %s31 = int_to_ptr.vmem [resolvable:$true] %s30
      %36 = dma.hbm_to_vmem [thread:$0]  %s29, 1024, %s31, [#allocation6], 64, 64, 4
    $region9: #{tpu_custom_call.1} parent=1 // pred_fallthru
      _
    // Predicated region
    $region10: #{tpu_custom_call.1} parent=1 // pred_check
      _
    $region11: #{tpu_custom_call.1} parent=1 // pred_check_branch
      %38 = sbr.rel (0) target = $region13
    $region12: #{tpu_custom_call.1} parent=1 // pred_region
      _
    $region13: #{tpu_custom_call.1} parent=1 // pred_fallthru
      _
    // Predicated region
    $region14: #{tpu_custom_call.1} parent=1 // pred_check
      _
    $region15: #{tpu_custom_call.1} parent=1 // pred_check_branch
      %40 = sbr.rel (0) target = $region17
    $region16: #{tpu_custom_call.1} parent=1 // pred_region
      %42 = dma.done [#allocation3], 1024
    $region17: #{tpu_custom_call.1} parent=1 // pred_fallthru
      _
    // Predicated region
    $region18: #{tpu_custom_call.1} parent=1 // pred_check
      _
    $region19: #{tpu_custom_call.1} parent=1 // pred_check_branch
      %44 = sbr.rel (0) target = $region21
    $region20: #{tpu_custom_call.1} parent=1 // pred_region
      %46 = dma.done [#allocation6], 1024
    $region21: #{tpu_custom_call.1} parent=1 // pred_fallthru
      _
    %v47 = vld [vmem:[#allocation2] sm:$0xf]
    %v48 = vld [vmem:[#allocation2 + $0x4] sm:$0xf]
    %v49 = vld [vmem:[#allocation2 + $0x8] sm:$0xf]
    %v50 = vld [vmem:[#allocation2 + $0xc] sm:$0xf]
    %v51 = vld [vmem:[#allocation2 + $0x10] sm:$0xf]
    %v52 = vld [vmem:[#allocation2 + $0x14] sm:$0xf]
    %v53 = vld [vmem:[#allocation2 + $0x18] sm:$0xf]
    %v54 = vld [vmem:[#allocation2 + $0x1c] sm:$0xf]
    %v55 = vld [vmem:[#allocation2 + $0x20] sm:$0xf]
    %v56 = vld [vmem:[#allocation2 + $0x24] sm:$0xf]
    %v57 = vld [vmem:[#allocation2 + $0x28] sm:$0xf]
    %v58 = vld [vmem:[#allocation2 + $0x2c] sm:$0xf]
    %v59 = vld [vmem:[#allocation2 + $0x30] sm:$0xf]
    %v60 = vld [vmem:[#allocation2 + $0x34] sm:$0xf]
    %v61 = vld [vmem:[#allocation2 + $0x38] sm:$0xf]
    %v62 = vld [vmem:[#allocation2 + $0x3c] sm:$0xf]
    %v63 = vld [vmem:[#allocation5] sm:$0xf]
    %v64 = vld [vmem:[#allocation5 + $0x4] sm:$0xf]
    %v65 = vld [vmem:[#allocation5 + $0x8] sm:$0xf]
    %v66 = vld [vmem:[#allocation5 + $0xc] sm:$0xf]
    %v67 = vld [vmem:[#allocation5 + $0x10] sm:$0xf]
    %v68 = vld [vmem:[#allocation5 + $0x14] sm:$0xf]
    %v69 = vld [vmem:[#allocation5 + $0x18] sm:$0xf]
    %v70 = vld [vmem:[#allocation5 + $0x1c] sm:$0xf]
    %v71 = vld [vmem:[#allocation5 + $0x20] sm:$0xf]
    %v72 = vld [vmem:[#allocation5 + $0x24] sm:$0xf]
    %v73 = vld [vmem:[#allocation5 + $0x28] sm:$0xf]
    %v74 = vld [vmem:[#allocation5 + $0x2c] sm:$0xf]
    %v75 = vld [vmem:[#allocation5 + $0x30] sm:$0xf]
    %v76 = vld [vmem:[#allocation5 + $0x34] sm:$0xf]
    %v77 = vld [vmem:[#allocation5 + $0x38] sm:$0xf]
    %v78 = vld [vmem:[#allocation5 + $0x3c] sm:$0xf]
    %v79 = vld [vmem:[%s2] sm:$0x1]
    %v81 = vperm.slane %v79, 0
    %v99 = vunpack.c.l.b16 %v47
    %v100 = vunpack.c.l.b16 %v48
    %v101 = vunpack.c.l.b16 %v49
    %v102 = vunpack.c.l.b16 %v50
    %v103 = vunpack.c.l.b16 %v51
    %v104 = vunpack.c.l.b16 %v52
    %v105 = vunpack.c.l.b16 %v53
    %v106 = vunpack.c.l.b16 %v54
    %v107 = vunpack.c.l.b16 %v55
    %v108 = vunpack.c.l.b16 %v56
    %v109 = vunpack.c.l.b16 %v57
    %v110 = vunpack.c.l.b16 %v58
    %v111 = vunpack.c.l.b16 %v59
    %v112 = vunpack.c.l.b16 %v60
    %v113 = vunpack.c.l.b16 %v61
    %v114 = vunpack.c.l.b16 %v62
    %v115 = vpack.c.b16 %v100, %v99
    %v116 = vpack.c.b16 %v102, %v101
    %v117 = vpack.c.b16 %v104, %v103
    %v118 = vpack.c.b16 %v106, %v105
    %v119 = vpack.c.b16 %v108, %v107
    %v120 = vpack.c.b16 %v110, %v109
    %v121 = vpack.c.b16 %v112, %v111
    %v122 = vpack.c.b16 %v114, %v113
    %v147 = vunpack.c.l.b16 %v63
    %v148 = vunpack.c.l.b16 %v64
    %v149 = vunpack.c.l.b16 %v65
    %v150 = vunpack.c.l.b16 %v66
    %v151 = vunpack.c.l.b16 %v67
    %v152 = vunpack.c.l.b16 %v68
    %v153 = vunpack.c.l.b16 %v69
    %v154 = vunpack.c.l.b16 %v70
    %v155 = vunpack.c.l.b16 %v71
    %v156 = vunpack.c.l.b16 %v72
    %v157 = vunpack.c.l.b16 %v73
    %v158 = vunpack.c.l.b16 %v74
    %v159 = vunpack.c.l.b16 %v75
    %v160 = vunpack.c.l.b16 %v76
    %v161 = vunpack.c.l.b16 %v77
    %v162 = vunpack.c.l.b16 %v78
    %v163 = vpack.c.b16 %v148, %v147
    %v164 = vpack.c.b16 %v150, %v149
    %v165 = vpack.c.b16 %v152, %v151
    %v166 = vpack.c.b16 %v154, %v153
    %v167 = vpack.c.b16 %v156, %v155
    %v168 = vpack.c.b16 %v158, %v157
    %v169 = vpack.c.b16 %v160, %v159
    %v170 = vpack.c.b16 %v162, %v161
    %179 = vmatpush.bf16.msra.mxu0 %v170
    %180 = vmatpush.bf16.msra.mxu0 %v169
    %181 = vmatpush.bf16.msra.mxu0 %v168
    %182 = vmatpush.bf16.msra.mxu0 %v167
    %183 = vmatpush.bf16.msra.mxu0 %v166
    %184 = vmatpush.bf16.msra.mxu0 %v165
    %185 = vmatpush.bf16.msra.mxu0 %v164
    %186 = vmatpush.bf16.msra.mxu0 %v163
    %187 = vmatmul.bf16.gmra.mxu0 %v115
    %v188 = vpop.f32.mrf.mxu0
    %v189 = vadd.f32 %v81, %v188
    %v190 = vpop.f32.mrf.mxu0
    %v191 = vadd.f32 %v81, %v190
    %192 = vmatmul.bf16.gmra.mxu0 %v116
    %v193 = vpop.f32.mrf.mxu0
    %v194 = vadd.f32 %v81, %v193
    %v195 = vpop.f32.mrf.mxu0
    %v196 = vadd.f32 %v81, %v195
    %197 = vmatmul.bf16.gmra.mxu0 %v117
    %v198 = vpop.f32.mrf.mxu0
    %v199 = vadd.f32 %v81, %v198
    %v200 = vpop.f32.mrf.mxu0
    %v201 = vadd.f32 %v81, %v200
    %202 = vmatmul.bf16.gmra.mxu0 %v118
    %v203 = vpop.f32.mrf.mxu0
    %v204 = vadd.f32 %v81, %v203
    %v205 = vpop.f32.mrf.mxu0
    %v206 = vadd.f32 %v81, %v205
    %207 = vmatmul.bf16.gmra.mxu0 %v119
    %v208 = vpop.f32.mrf.mxu0
    %v209 = vadd.f32 %v81, %v208
    %v210 = vpop.f32.mrf.mxu0
    %v211 = vadd.f32 %v81, %v210
    %212 = vmatmul.bf16.gmra.mxu0 %v120
    %v213 = vpop.f32.mrf.mxu0
    %v214 = vadd.f32 %v81, %v213
    %v215 = vpop.f32.mrf.mxu0
    %v216 = vadd.f32 %v81, %v215
    %217 = vmatmul.bf16.gmra.mxu0 %v121
    %v218 = vpop.f32.mrf.mxu0
    %v219 = vadd.f32 %v81, %v218
    %v220 = vpop.f32.mrf.mxu0
    %v221 = vadd.f32 %v81, %v220
    %222 = vmatmul.bf16.gmra.mxu0 %v122
    %v223 = vpop.f32.mrf.mxu0
    %v224 = vadd.f32 %v81, %v223
    %v225 = vpop.f32.mrf.mxu0
    %v226 = vadd.f32 %v81, %v225
    %227 = vdwg.mxu0
    %v228 = vmax.f32 %v189, 0.0
    %v229 = vmax.f32 %v191, 0.0
    %v230 = vmax.f32 %v194, 0.0
    %v231 = vmax.f32 %v196, 0.0
    %v232 = vmax.f32 %v199, 0.0
    %v233 = vmax.f32 %v201, 0.0
    %v234 = vmax.f32 %v204, 0.0
    %v235 = vmax.f32 %v206, 0.0
    %v236 = vmax.f32 %v209, 0.0
    %v237 = vmax.f32 %v211, 0.0
    %v238 = vmax.f32 %v214, 0.0
    %v239 = vmax.f32 %v216, 0.0
    %v240 = vmax.f32 %v219, 0.0
    %v241 = vmax.f32 %v221, 0.0
    %v242 = vmax.f32 %v224, 0.0
    %v243 = vmax.f32 %v226, 0.0
    %v244 = vpack.c.bf16 %v228, %v228
    %v245 = vpack.c.bf16 %v229, %v229
    %v246 = vpack.c.bf16 %v230, %v230
    %v247 = vpack.c.bf16 %v231, %v231
    %v248 = vpack.c.bf16 %v232, %v232
    %v249 = vpack.c.bf16 %v233, %v233
    %v250 = vpack.c.bf16 %v234, %v234
    %v251 = vpack.c.bf16 %v235, %v235
    %v252 = vpack.c.bf16 %v236, %v236
    %v253 = vpack.c.bf16 %v237, %v237
    %v254 = vpack.c.bf16 %v238, %v238
    %v255 = vpack.c.bf16 %v239, %v239
    %v256 = vpack.c.bf16 %v240, %v240
    %v257 = vpack.c.bf16 %v241, %v241
    %v258 = vpack.c.bf16 %v242, %v242
    %v259 = vpack.c.bf16 %v243, %v243
    %260 = vst [vmem:[#allocation7] sm:$0xf] %v244
    %261 = vst [vmem:[#allocation7 + $0x4] sm:$0xf] %v245
    %262 = vst [vmem:[#allocation7 + $0x8] sm:$0xf] %v246
    %263 = vst [vmem:[#allocation7 + $0xc] sm:$0xf] %v247
    %264 = vst [vmem:[#allocation7 + $0x10] sm:$0xf] %v248
    %265 = vst [vmem:[#allocation7 + $0x14] sm:$0xf] %v249
    %266 = vst [vmem:[#allocation7 + $0x18] sm:$0xf] %v250
    %267 = vst [vmem:[#allocation7 + $0x1c] sm:$0xf] %v251
    %268 = vst [vmem:[#allocation7 + $0x20] sm:$0xf] %v252
    %269 = vst [vmem:[#allocation7 + $0x24] sm:$0xf] %v253
    %270 = vst [vmem:[#allocation7 + $0x28] sm:$0xf] %v254
    %271 = vst [vmem:[#allocation7 + $0x2c] sm:$0xf] %v255
    %272 = vst [vmem:[#allocation7 + $0x30] sm:$0xf] %v256
    %273 = vst [vmem:[#allocation7 + $0x34] sm:$0xf] %v257
    %274 = vst [vmem:[#allocation7 + $0x38] sm:$0xf] %v258
    %275 = vst [vmem:[#allocation7 + $0x3c] sm:$0xf] %v259
    // Predicated region
    $region22: #{tpu_custom_call.1} parent=1 // pred_check
      _
    $region23: #{tpu_custom_call.1} parent=1 // pred_check_branch
      %277 = sbr.rel (0) target = $region25
    $region24: #{tpu_custom_call.1} parent=1 // pred_region
      %279 = vsyncadd [#allocation4], 0
      %s280 = sshll.u32 [#allocation7], 4
      %s281 = int_to_ptr.vmem [resolvable:$true] %s280
      %s282 = sshll.u32 %s3, 4
      %s283 = int_to_ptr.hbm [resolvable:$true] %s282
      %288 = dma.vmem_to_hbm [thread:$0]  %s281, 1024, %s283, [#allocation4], 64, 64, 4
    $region25: #{tpu_custom_call.1} parent=1 // pred_fallthru
      _
    // Predicated region
    $region26: #{tpu_custom_call.1} parent=1 // pred_check
      _
    $region27: #{tpu_custom_call.1} parent=1 // pred_check_branch
      %290 = sbr.rel (0) target = $region29
    $region28: #{tpu_custom_call.1} parent=1 // pred_region
      %292 = dma.done [#allocation4], 1024
    $region29: #{tpu_custom_call.1} parent=1 // pred_fallthru
      _
    %293 = vsyncpa [#allocation3], 1
    %294 = vsyncpa [#allocation6], 1
    %295 = vsyncpa [#allocation4], 1

</llo_original>
